<compile_context>
chip_gen: v7x
topology: tpu7x:2x2x1
jax: 0.10.0
libtpu: 0.0.40
codegen_flags: <defaults>
</compile_context>

<pallas_src>
import jax
import jax.numpy as jnp
from jax.experimental import pallas as pl
from jax.experimental.pallas import tpu as pltpu

_LANE = 128


def _round_up(x, m):
    return ((x + m - 1) // m) * m


def _cdiv(a, b):
    return (a + b - 1) // b


def _sublane(dtype):
    # minimal second-to-last-dim tile per dtype (f32: 8, bf16: 16, int8/fp8: 32)
    return {4: 8, 2: 16, 1: 32}[jnp.dtype(dtype).itemsize]


# ----------------------------------------------------------------------------- kernel
def mlp_kernel(x_ref, w1_ref, w2_ref, o_ref, acc_ref):
    """One (TM batch-tile, TN hidden-chunk) step.

    x_ref  : (TM, D_p)   activations (compute dtype)
    w1_ref : (D_p, TN)   pre-transposed layer1 chunk
    w2_ref : (TN, O_p)   pre-transposed layer2 chunk
    o_ref  : (TM, O_p)   output tile (written on last hidden chunk)
    acc_ref: (TM, O_p)   f32 accumulator scratch over the hidden-chunk axis
    """
    k = pl.program_id(1)

    @pl.when(k == 0)
    def _():
        acc_ref[...] = jnp.zeros_like(acc_ref)

    # layer1 chunk: (TM, D_p) @ (D_p, TN) -> (TM, TN), f32 accumulation on MXU.
    h = jnp.dot(x_ref[...], w1_ref[...], preferred_element_type=jnp.float32)
    # quadratic activation: elementwise square, kept in f32 on the VPU.
    h = h * h
    # layer2 chunk: (TM, TN) @ (TN, O_p) -> (TM, O_p); exact chunked sum since the
    # activation is elementwise per hidden unit.
    acc_ref[...] += jnp.dot(h.astype(w2_ref.dtype), w2_ref[...],
                            preferred_element_type=jnp.float32)

    @pl.when(k == pl.num_programs(1) - 1)
    def _():
        o_ref[...] = acc_ref[...].astype(o_ref.dtype)


# ------------------------------------------------------------------- parameter prep
def prepare_simple_mlp_params(w1, w2, compute_dtype=jnp.bfloat16):
    """One-time prep: cast, transpose to MXU-canonical NN layout, zero-pad to lanes.

    w1: (N, D), w2: (O, N) in PyTorch nn.Linear (out_features, in_features) layout.
    Returns W1t (D_p, N_p) and W2t (N_p, O_p).  Zero padding is semantics-preserving
    (padded hidden columns are 0 -> 0 after squaring; padded output cols are sliced).
    bf16 operands are the default (f32 MXU accumulation; the square stays in f32).
    """
    N, D = w1.shape
    O, N2 = w2.shape
    assert N2 == N, "w2's in_features must match w1's out_features"
    cdt = jnp.dtype(compute_dtype)
    # NOTE: 128-lane alignment; padding to 256 multiples can help v6e/v7x 256x256 MXUs
    # marginally when the extra zero-pad is small.
    D_p, N_p, O_p = _round_up(D, _LANE), _round_up(N, _LANE), _round_up(O, _LANE)
    w1t = jnp.pad(w1.astype(cdt).T, ((0, D_p - D), (0, N_p - N)))   # (D_p, N_p)
    w2t = jnp.pad(w2.astype(cdt).T, ((0, N_p - N), (0, O_p - O)))   # (N_p, O_p)
    return {"w1t": w1t, "w2t": w2t, "dims": (D, N, O)}


# ---------------------------------------------------------------------- tile picking
def _vmem_plan():
    """Per-generation VMEM limit / budget and 2-TensorCore hint."""
    cap = 64 << 20  # conservative fallback (v7x per-TC)
    try:
        cap = int(getattr(pltpu.get_tpu_info(), "vmem_capacity_bytes", cap))
    except Exception:
        pass
    vmem_limit = min(int(cap * 0.78), 100 << 20)   # ~100 MiB v5e/v6e, ~50 MiB v7x
    budget = int(cap * 0.65)                        # headroom for compiler scratch
    two_core = cap <= (96 << 20)                    # v7x: 64 MiB/TC, 2 TCs per chip
    return vmem_limit, budget, two_core


def _pick_tiles(B, D_p, N_p, O_p, cdt_size, out_size, sub, budget, two_core,
                hidden_chunk=None, tm_cap=1024):
    # Weight chunks are DOUBLE-buffered by the default Pallas pipeline even with a
    # constant index_map, so count them 2x.
    def chunk_w_bytes(tn):
        return 2 * tn * (D_p + O_p) * cdt_size

    # Largest hidden chunk (multiple of 128, dividing N_p) whose weights fit half
    # the budget; the rest of the budget goes to batch tiles.
    cands = [t for t in range(N_p, 0, -_LANE) if N_p % t == 0]
    tn = next((t for t in cands if chunk_w_bytes(t) <= budget // 2), _LANE)
    if hidden_chunk is not None:
        tn = min(tn, hidden_chunk)

    per_row = (2 * D_p * cdt_size        # double-buffered x tile
               + 2 * O_p * out_size      # double-buffered out tile
               + O_p * 4                 # f32 accumulator scratch
               + tn * (4 + cdt_size))    # f32 h chunk + its compute-dtype cast
    avail = max(budget - chunk_w_bytes(tn), per_row * sub)
    tm = min(tm_cap, avail // per_row)
    if two_core and B >= 2 * sub:
        # Keep >= 2 batch-grid steps so the "parallel" axis feeds both v7x TCs.
        tm = min(tm, _round_up(_cdiv(B, 2), sub))
    tm = min(tm, _round_up(B, sub))
    tm = max(sub, (tm // sub) * sub)
    return int(tm), int(tn)


# --------------------------------------------------------------------------- forward
def simple_mlp_forward(x, params, hidden_chunk=None):
    """x: (B, D) activations; params from prepare_simple_mlp_params."""
    w1t, w2t = params["w1t"], params["w2t"]
    D, N, O = params["dims"]
    B, Dx = x.shape
    assert Dx == D, "input feature dim mismatch"
    D_p, N_p = w1t.shape
    _, O_p = w2t.shape
    cdt = w1t.dtype
    out_dtype = x.dtype

    vmem_limit, budget, two_core = _vmem_plan()
    sub = max(_sublane(cdt), _sublane(out_dtype))
    tm, tn = _pick_tiles(B, D_p, N_p, O_p,
                         jnp.dtype(cdt).itemsize, jnp.dtype(out_dtype).itemsize,
                         sub, budget, two_core, hidden_chunk=hidden_chunk)
    B_pad = _round_up(B, tm)
    nk = N_p // tn
    grid = (B_pad // tm, nk)

    # Cheap fused pad of the activations only when actually needed.
    x_c = x.astype(cdt)
    if B_pad != B or D_p != D:
        x_c = jnp.pad(x_c, ((0, B_pad - B), (0, D_p - D)))

    flops = 2 * B_pad * D_p * N_p + 2 * B_pad * N_p * O_p + B_pad * N_p
    bytes_accessed = ((B_pad * D_p + N_p * D_p + N_p * O_p) * jnp.dtype(cdt).itemsize
                      + B_pad * O_p * jnp.dtype(out_dtype).itemsize)

    out_p = pl.pallas_call(
        mlp_kernel,
        out_shape=jax.ShapeDtypeStruct((B_pad, O_p), out_dtype),
        grid_spec=pltpu.PrefetchScalarGridSpec(
            num_scalar_prefetch=0,
            grid=grid,
            in_specs=[
                pl.BlockSpec((tm, D_p), lambda i, k: (i, 0)),   # batch-tiled x (pipelined)
                pl.BlockSpec((D_p, tn), lambda i, k: (0, k)),   # W1t hidden chunk
                pl.BlockSpec((tn, O_p), lambda i, k: (k, 0)),   # W2t hidden chunk
            ],
            out_specs=pl.BlockSpec((tm, O_p), lambda i, k: (i, 0)),
            scratch_shapes=[pltpu.VMEM((tm, O_p), jnp.float32)],
        ),
        compiler_params=pltpu.CompilerParams(
            # batch axis parallel (megacore-shardable on v7x), hidden axis is a reduction
            dimension_semantics=("parallel", "arbitrary"),
            vmem_limit_bytes=int(vmem_limit)),
        cost_estimate=pl.CostEstimate(
            flops=int(flops), transcendentals=0, bytes_accessed=int(bytes_accessed)),
    )(x_c, w1t, w2t)

    if B_pad != B or O_p != O:
        out_p = out_p[:B, :O]
    return out_p


def reference_forward(x, w1, w2):
    h = x @ w1.T
    h = h ** 2
    return h @ w2.T


if __name__ == "__main__":
    key = jax.random.PRNGKey(0)
    k1, k2, kx, k3, k4, ky = jax.random.split(key, 6)

    # ---- Small shapes consistent with SimpleMLP(input_dim=32, hidden_dim=64, output_dim=16).
    B, D, N, O = 8, 32, 64, 16
    bound1, bound2 = 1.0 / (D ** 0.5), 1.0 / (N ** 0.5)
    w1 = jax.random.uniform(k1, (N, D), jnp.float32, -bound1, bound1)
    w2 = jax.random.uniform(k2, (O, N), jnp.float32, -bound2, bound2)
    x = jax.random.normal(kx, (B, D), jnp.float32)
    ref = reference_forward(x, w1, w2)

    # Default path: bf16 MXU operands, f32 accumulation, f32 square.
    params_bf16 = prepare_simple_mlp_params(w1, w2)
    out_bf16 = jax.block_until_ready(simple_mlp_forward(x, params_bf16))
    assert out_bf16.shape == (B, O)
    assert jnp.allclose(out_bf16, ref, atol=5e-2, rtol=5e-2)

    # f32 operand path: bit-faithful to the PyTorch module, tight tolerance.
    params_f32 = prepare_simple_mlp_params(w1, w2, compute_dtype=jnp.float32)
    out_f32 = jax.block_until_ready(simple_mlp_forward(x, params_f32))
    assert out_f32.shape == (B, O)
    assert jnp.allclose(out_f32, ref, atol=1e-5, rtol=1e-5)

    # ---- Exercise the hidden-dim reduction path (nk > 1) and multi-step batch grid.
    B2, D2, N2, O2 = 32, 64, 256, 48
    b1, b2 = 1.0 / (D2 ** 0.5), 1.0 / (N2 ** 0.5)
    w1b = jax.random.uniform(k3, (N2, D2), jnp.float32, -b1, b1)
    w2b = jax.random.uniform(k4, (O2, N2), jnp.float32, -b2, b2)
    xb = jax.random.normal(ky, (B2, D2), jnp.float32)
    refb = reference_forward(xb, w1b, w2b)

    params_b = prepare_simple_mlp_params(w1b, w2b, compute_dtype=jnp.float32)
    out_b = jax.block_until_ready(simple_mlp_forward(xb, params_b, hidden_chunk=128))
    assert out_b.shape == (B2, O2)
    assert jnp.allclose(out_b, refb, atol=1e-4, rtol=1e-4)

    print("KERNEL_OK")
</pallas_src>

<mosaic_0001>
module attributes {stable_mosaic.version = 11 : i64} {
  func.func @mlp_kernel(%arg0: i32, %arg1: i32, %arg2: memref<16x128xbf16, #tpu.memory_space<vmem>>, %arg3: memref<128x128xbf16, #tpu.memory_space<vmem>>, %arg4: memref<128x128xbf16, #tpu.memory_space<vmem>>, %arg5: memref<16x128xf32, #tpu.memory_space<vmem>>, %arg6: memref<16x128xf32, #tpu.memory_space<vmem>>) attributes {dimension_semantics = [#tpu.dimension_semantics<parallel>, #tpu.dimension_semantics<arbitrary>], iteration_bounds = array<i64: 1, 1>, scalar_prefetch = 0 : i64, scratch_operands = 1 : i64, tpu.core_type = #tpu.core_type<tc>, window_params = [{transform_indices = @transform_0, window_bounds = array<i64: 16, 128>}, {transform_indices = @transform_1, window_bounds = array<i64: 128, 128>}, {transform_indices = @transform_2, window_bounds = array<i64: 128, 128>}, {transform_indices = @transform_3, window_bounds = array<i64: 16, 128>}]} {
    %c0_i32 = arith.constant 0 : i32
    %0 = arith.cmpi eq, %arg1, %c0_i32 : i32
    %1 = arith.extui %0 : i1 to i32
    %c0_i32_0 = arith.constant 0 : i32
    %2 = arith.cmpi ne, %1, %c0_i32_0 : i32
    scf.if %2 {
      %cst_13 = arith.constant 0.000000e+00 : f32
      %16 = vector.broadcast %cst_13 : f32 to vector<16x128xf32>
      %c0_14 = arith.constant 0 : index
      %c0_15 = arith.constant 0 : index
      %17 = vector.load %arg6[%c0_14, %c0_15] : memref<16x128xf32, #tpu.memory_space<vmem>>, vector<16x128xf32>
      tpu.vector_store %arg6[%c0_14, %c0_15], %16 {strides = array<i32>} : memref<16x128xf32, #tpu.memory_space<vmem>>, vector<16x128xf32>,
    } else {
    }
    %c0 = arith.constant 0 : index
    %c0_1 = arith.constant 0 : index
    %3 = vector.load %arg2[%c0, %c0_1] : memref<16x128xbf16, #tpu.memory_space<vmem>>, vector<16x128xbf16>
    %c0_2 = arith.constant 0 : index
    %c0_3 = arith.constant 0 : index
    %4 = vector.load %arg3[%c0_2, %c0_3] : memref<128x128xbf16, #tpu.memory_space<vmem>>, vector<128x128xbf16>
    %cst = arith.constant dense<0.000000e+00> : vector<16x128xf32>
    %5 = tpu.matmul %3, %4, %cst {dimension_numbers = #tpu.dot_dimension_numbers<[1], [0], [0], [1], [0, 0, 1, 1], [], []>} : vector<16x128xbf16>, vector<128x128xbf16>, vector<16x128xf32> -> vector<16x128xf32>
    %6 = arith.mulf %5, %5 : vector<16x128xf32>
    %c0_4 = arith.constant 0 : index
    %c0_5 = arith.constant 0 : index
    %7 = vector.load %arg6[%c0_4, %c0_5] : memref<16x128xf32, #tpu.memory_space<vmem>>, vector<16x128xf32>
    %8 = arith.truncf %6 : vector<16x128xf32> to vector<16x128xbf16>
    %c0_6 = arith.constant 0 : index
    %c0_7 = arith.constant 0 : index
    %9 = vector.load %arg4[%c0_6, %c0_7] : memref<128x128xbf16, #tpu.memory_space<vmem>>, vector<128x128xbf16>
    %cst_8 = arith.constant dense<0.000000e+00> : vector<16x128xf32>
    %10 = tpu.matmul %8, %9, %cst_8 {dimension_numbers = #tpu.dot_dimension_numbers<[1], [0], [0], [1], [0, 0, 1, 1], [], []>} : vector<16x128xbf16>, vector<128x128xbf16>, vector<16x128xf32> -> vector<16x128xf32>
    %11 = arith.addf %7, %10 : vector<16x128xf32>
    %c0_9 = arith.constant 0 : index
    %c0_10 = arith.constant 0 : index
    %12 = vector.load %arg6[%c0_9, %c0_10] : memref<16x128xf32, #tpu.memory_space<vmem>>, vector<16x128xf32>
    tpu.vector_store %arg6[%c0_9, %c0_10], %11 {strides = array<i32>} : memref<16x128xf32, #tpu.memory_space<vmem>>, vector<16x128xf32>,
    %c0_i32_11 = arith.constant 0 : i32
    %13 = arith.cmpi eq, %arg1, %c0_i32_11 : i32
    %14 = arith.extui %13 : i1 to i32
    %c0_i32_12 = arith.constant 0 : i32
    %15 = arith.cmpi ne, %14, %c0_i32_12 : i32
    scf.if %15 {
      %c0_13 = arith.constant 0 : index
      %c0_14 = arith.constant 0 : index
      %16 = vector.load %arg6[%c0_13, %c0_14] : memref<16x128xf32, #tpu.memory_space<vmem>>, vector<16x128xf32>
      %c0_15 = arith.constant 0 : index
      %c0_16 = arith.constant 0 : index
      %17 = vector.load %arg5[%c0_15, %c0_16] : memref<16x128xf32, #tpu.memory_space<vmem>>, vector<16x128xf32>
      tpu.vector_store %arg5[%c0_15, %c0_16], %16 {strides = array<i32>} : memref<16x128xf32, #tpu.memory_space<vmem>>, vector<16x128xf32>,
    } else {
    }
    return
  }
  func.func @transform_0(%arg0: i32, %arg1: i32) -> (i32, i32) {
    %c0_i32 = arith.constant 0 : i32
    %c0_i32_0 = arith.constant 0 : i32
    return %arg0, %c0_i32 : i32, i32
  }
  func.func @transform_1(%arg0: i32, %arg1: i32) -> (i32, i32) {
    %c0_i32 = arith.constant 0 : i32
    %c0_i32_0 = arith.constant 0 : i32
    return %c0_i32, %arg1 : i32, i32
  }
  func.func @transform_2(%arg0: i32, %arg1: i32) -> (i32, i32) {
    %c0_i32 = arith.constant 0 : i32
    %c0_i32_0 = arith.constant 0 : i32
    return %arg1, %c0_i32 : i32, i32
  }
  func.func @transform_3(%arg0: i32, %arg1: i32) -> (i32, i32) {
    %c0_i32 = arith.constant 0 : i32
    %c0_i32_0 = arith.constant 0 : i32
    return %arg0, %c0_i32 : i32, i32
  }
}

</mosaic_0001>

<llo_original>
// kernel: tpu_custom_call.1
$region0: #{tpu_custom_call.1}
  #allocation0 [shape = 'u32[]', space=smem, size = 0x4, offset = 0x4, fixed_abs, tag = 'smem constant byte address 0x4 - core index']
  #allocation1 [shape = 'u32[144,128]{1,0:T(1,128)}', space=vmem, size = 0x12000, scoped, tag = 'internal scratch']
  #allocation2 [shape = 'f32[16,128]{1,0:T(8,128)}', space=vmem, size = 0x2000, scoped, tag = 'scratch operand']
  %s0 = inlined_call_operand.hbm [shape: bf16[16,128], index: 0, kind: input, shape index: {}]
  %s1 = inlined_call_operand.hbm [shape: bf16[128,128], index: 1, kind: input, shape index: {}]
  %s2 = inlined_call_operand.hbm [shape: bf16[128,128], index: 2, kind: input, shape index: {}]
  %s3 = inlined_call_operand.hbm [shape: f32[16,128], index: 3, kind: output, shape index: {}]
  %s4 = sld [smem:[#allocation0]]
  $region42: #{tpu_custom_call.1} parent=0
    _
  %s6 = ssub.s32 1, %s4
  %s7 = scalar_select 0, %s6, %s4
  $region1: #{tpu_custom_call.1} parent=0
    #allocation3 [shape = 'u8[4096]{0}', space=vmem, size = 0x1000, scoped, tag = 'input window, operand 0, single buffered']
    #allocation4 [shape = 's32[1]{0}', space=sflag, size = 0x4, scoped, tag = 'scoped memory for tpu_custom_call.1']
    #allocation5 [shape = 's32[1]{0}', space=sflag, size = 0x4, scoped, tag = 'scoped memory for tpu_custom_call.1']
    #allocation6 [shape = 'u8[32768]{0}', space=vmem, size = 0x8000, scoped, tag = 'input window, operand 1, single buffered']
    #allocation7 [shape = 's32[1]{0}', space=sflag, size = 0x4, scoped, tag = 'scoped memory for tpu_custom_call.1']
    #allocation8 [shape = 'u8[32768]{0}', space=vmem, size = 0x8000, scoped, tag = 'input window, operand 2, single buffered']
    #allocation9 [shape = 'u8[8192]{0}', space=vmem, size = 0x2000, scoped, tag = 'output window, operand 0, single buffered']
    %8 = vsyncpa [#allocation4], 0
    %9 = vsyncpa [#allocation7], 0
    %10 = vsyncpa [#allocation5], 0
    // Predicated region
    $region2: #{tpu_custom_call.1} parent=1 // pred_check
      _
    $region3: #{tpu_custom_call.1} parent=1 // pred_check_branch
      %12 = sbr.rel (0) target = $region5
    $region4: #{tpu_custom_call.1} parent=1 // pred_region
      %s14 = ssub.s32 128, 128
      %15 = vsyncadd [#allocation4], %s14
      %s16 = sshll.u32 [#allocation3], 4
      %s17 = int_to_ptr.vmem [resolvable:$true] %s16
      %22 = dma.hbm_to_vmem [thread:$0]  %s0, 128, %s17, [#allocation4], 64, 64, 4
    $region5: #{tpu_custom_call.1} parent=1 // pred_fallthru
      _
    // Predicated region
    $region6: #{tpu_custom_call.1} parent=1 // pred_check
      _
    $region7: #{tpu_custom_call.1} parent=1 // pred_check_branch
      %24 = sbr.rel (0) target = $region9
    $region8: #{tpu_custom_call.1} parent=1 // pred_region
      %s26 = ssub.s32 1024, 1024
      %27 = vsyncadd [#allocation7], %s26
      %s28 = sshll.u32 [#allocation6], 4
      %s29 = int_to_ptr.vmem [resolvable:$true] %s28
      %34 = dma.hbm_to_vmem [thread:$0]  %s1, 1024, %s29, [#allocation7], 64, 64, 4
    $region9: #{tpu_custom_call.1} parent=1 // pred_fallthru
      _
    // Predicated region
    $region10: #{tpu_custom_call.1} parent=1 // pred_check
      _
    $region11: #{tpu_custom_call.1} parent=1 // pred_check_branch
      %36 = sbr.rel (0) target = $region13
    $region12: #{tpu_custom_call.1} parent=1 // pred_region
      %s38 = ssub.s32 1024, 1024
      %39 = vsyncadd [#allocation7], %s38
      %s40 = sshll.u32 [#allocation8], 4
      %s41 = int_to_ptr.vmem [resolvable:$true] %s40
      %46 = dma.hbm_to_vmem [thread:$0]  %s2, 1024, %s41, [#allocation7], 64, 64, 4
    $region13: #{tpu_custom_call.1} parent=1 // pred_fallthru
      _
    // Predicated region
    $region14: #{tpu_custom_call.1} parent=1 // pred_check
      _
    $region15: #{tpu_custom_call.1} parent=1 // pred_check_branch
      %48 = sbr.rel (0) target = $region17
    $region16: #{tpu_custom_call.1} parent=1 // pred_region
      %49 = dma.done [#allocation4], 128
    $region17: #{tpu_custom_call.1} parent=1 // pred_fallthru
      _
    // Predicated region
    $region18: #{tpu_custom_call.1} parent=1 // pred_check
      _
    $region19: #{tpu_custom_call.1} parent=1 // pred_check_branch
      %51 = sbr.rel (0) target = $region21
    $region20: #{tpu_custom_call.1} parent=1 // pred_region
      %52 = dma.done [#allocation7], 1024
    $region21: #{tpu_custom_call.1} parent=1 // pred_fallthru
      _
    // Predicated region
    $region22: #{tpu_custom_call.1} parent=1 // pred_check
      _
    $region23: #{tpu_custom_call.1} parent=1 // pred_check_branch
      %54 = sbr.rel (0) target = $region25
    $region24: #{tpu_custom_call.1} parent=1 // pred_region
      %55 = dma.done [#allocation7], 1024
    $region25: #{tpu_custom_call.1} parent=1 // pred_fallthru
      _
    %p57 = scmp.eq.s32.totalorder 0, 0
    // Predicated region
    $region26: #{tpu_custom_call.1} parent=1 // pred_check
      %p58 = pneg %p57
    $region27: #{tpu_custom_call.1} parent=1 // pred_check_branch
      %60 = sbr.rel (%p58) target = $region29
    $region28: #{tpu_custom_call.1} parent=1 // pred_region
      %61 = vst [vmem:[#allocation2] sm:$0xff] 0.0
      %62 = vst [vmem:[#allocation2 + $0x8] sm:$0xff] 0.0
    $region29: #{tpu_custom_call.1} parent=1 // pred_fallthru
      _
    %v63 = vld [vmem:[#allocation3] sm:$0xf]
    %v64 = vld [vmem:[#allocation3 + $0x4] sm:$0xf]
    %v65 = vld [vmem:[#allocation6] sm:$0xf]
    %v66 = vld [vmem:[#allocation6 + $0x4] sm:$0xf]
    %v67 = vld [vmem:[#allocation6 + $0x8] sm:$0xf]
    %v68 = vld [vmem:[#allocation6 + $0xc] sm:$0xf]
    %v69 = vld [vmem:[#allocation6 + $0x10] sm:$0xf]
    %v70 = vld [vmem:[#allocation6 + $0x14] sm:$0xf]
    %v71 = vld [vmem:[#allocation6 + $0x18] sm:$0xf]
    %v72 = vld [vmem:[#allocation6 + $0x1c] sm:$0xf]
    %v73 = vld [vmem:[#allocation6 + $0x20] sm:$0xf]
    %v74 = vld [vmem:[#allocation6 + $0x24] sm:$0xf]
    %v75 = vld [vmem:[#allocation6 + $0x28] sm:$0xf]
    %v76 = vld [vmem:[#allocation6 + $0x2c] sm:$0xf]
    %v77 = vld [vmem:[#allocation6 + $0x30] sm:$0xf]
    %v78 = vld [vmem:[#allocation6 + $0x34] sm:$0xf]
    %v79 = vld [vmem:[#allocation6 + $0x38] sm:$0xf]
    %v80 = vld [vmem:[#allocation6 + $0x3c] sm:$0xf]
    %v83 = vunpack.c.l.b16 %v63
    %v84 = vunpack.c.l.b16 %v64
    %v85 = vpack.c.b16 %v84, %v83
    %v103 = vunpack.c.l.b16 %v65
    %v104 = vunpack.c.l.b16 %v66
    %v105 = vunpack.c.l.b16 %v67
    %v106 = vunpack.c.l.b16 %v68
    %v107 = vunpack.c.l.b16 %v69
    %v108 = vunpack.c.l.b16 %v70
    %v109 = vunpack.c.l.b16 %v71
    %v110 = vunpack.c.l.b16 %v72
    %v111 = vunpack.c.l.b16 %v73
    %v112 = vunpack.c.l.b16 %v74
    %v113 = vunpack.c.l.b16 %v75
    %v114 = vunpack.c.l.b16 %v76
    %v115 = vunpack.c.l.b16 %v77
    %v116 = vunpack.c.l.b16 %v78
    %v117 = vunpack.c.l.b16 %v79
    %v118 = vunpack.c.l.b16 %v80
    %v119 = vpack.c.b16 %v104, %v103
    %v120 = vpack.c.b16 %v106, %v105
    %v121 = vpack.c.b16 %v108, %v107
    %v122 = vpack.c.b16 %v110, %v109
    %v123 = vpack.c.b16 %v112, %v111
    %v124 = vpack.c.b16 %v114, %v113
    %v125 = vpack.c.b16 %v116, %v115
    %v126 = vpack.c.b16 %v118, %v117
    %135 = vmatprep.subr.bf16.mxu0 0
    %136 = vmatpush1.bf16.msra.mxu0 %v119
    %137 = vmatprep.subr.bf16.mxu0 0
    %138 = vmatpush1.bf16.msra.mxu0 %v120
    %139 = vmatprep.subr.bf16.mxu0 0
    %140 = vmatpush1.bf16.msra.mxu0 %v121
    %141 = vmatprep.subr.bf16.mxu0 0
    %142 = vmatpush1.bf16.msra.mxu0 %v122
    %143 = vmatprep.subr.bf16.mxu0 0
    %144 = vmatpush1.bf16.msra.mxu0 %v123
    %145 = vmatprep.subr.bf16.mxu0 0
    %146 = vmatpush1.bf16.msra.mxu0 %v124
    %147 = vmatprep.subr.bf16.mxu0 0
    %148 = vmatpush1.bf16.msra.mxu0 %v125
    %149 = vmatprep.subr.bf16.mxu0 0
    %150 = vmatpush1.bf16.msra.mxu0 %v126
    %151 = vmatprep.subr.bf16.mxu0 0
    %152 = vmatpush1.bf16.msra.mxu0 0
    %153 = vmatprep.subr.bf16.mxu0 0
    %154 = vmatpush1.bf16.msra.mxu0 0
    %155 = vmatprep.subr.bf16.mxu0 0
    %156 = vmatpush1.bf16.msra.mxu0 0
    %157 = vmatprep.subr.bf16.mxu0 0
    %158 = vmatpush1.bf16.msra.mxu0 0
    %159 = vmatprep.subr.bf16.mxu0 0
    %160 = vmatpush1.bf16.msra.mxu0 0
    %161 = vmatprep.subr.bf16.mxu0 0
    %162 = vmatpush1.bf16.msra.mxu0 0
    %163 = vmatprep.subr.bf16.mxu0 0
    %164 = vmatpush1.bf16.msra.mxu0 0
    %165 = vmatprep.subr.bf16.mxu0 0
    %166 = vmatpush1.bf16.msra.mxu0 0
    %167 = vmatprep.mubr.bf16.mxu0 0
    %168 = vmatmul.mubr.bf16.gmra.mrb[0].mxu0 %v85
    %v169 = vpop.f32.mrb[0].mxu0
    %v170 = vadd.f32 0.0, %v169
    %v171 = vpop.f32.mrb[0].mxu0
    %v172 = vpop.f32.mrb[0].mxu0
    %v173 = vadd.f32 0.0, %v172
    %v174 = vpop.f32.mrb[0].mxu0
    %175 = vdwg.mxu0
    %v176 = vmul.f32 %v170, %v170
    %v177 = vmul.f32 %v173, %v173
    %v178 = vld [vmem:[#allocation2] sm:$0xff]
    %v179 = vld [vmem:[#allocation2 + $0x8] sm:$0xff]
    %v180 = vpack.c.bf16 %v177, %v176
    %v181 = vld [vmem:[#allocation8] sm:$0xf]
    %v182 = vld [vmem:[#allocation8 + $0x4] sm:$0xf]
    %v183 = vld [vmem:[#allocation8 + $0x8] sm:$0xf]
    %v184 = vld [vmem:[#allocation8 + $0xc] sm:$0xf]
    %v185 = vld [vmem:[#allocation8 + $0x10] sm:$0xf]
    %v186 = vld [vmem:[#allocation8 + $0x14] sm:$0xf]
    %v187 = vld [vmem:[#allocation8 + $0x18] sm:$0xf]
    %v188 = vld [vmem:[#allocation8 + $0x1c] sm:$0xf]
    %v189 = vld [vmem:[#allocation8 + $0x20] sm:$0xf]
    %v190 = vld [vmem:[#allocation8 + $0x24] sm:$0xf]
    %v191 = vld [vmem:[#allocation8 + $0x28] sm:$0xf]
    %v192 = vld [vmem:[#allocation8 + $0x2c] sm:$0xf]
    %v193 = vld [vmem:[#allocation8 + $0x30] sm:$0xf]
    %v194 = vld [vmem:[#allocation8 + $0x34] sm:$0xf]
    %v195 = vld [vmem:[#allocation8 + $0x38] sm:$0xf]
    %v196 = vld [vmem:[#allocation8 + $0x3c] sm:$0xf]
    %v213 = vunpack.c.l.b16 %v181
    %v214 = vunpack.c.l.b16 %v182
    %v215 = vunpack.c.l.b16 %v183
    %v216 = vunpack.c.l.b16 %v184
    %v217 = vunpack.c.l.b16 %v185
    %v218 = vunpack.c.l.b16 %v186
    %v219 = vunpack.c.l.b16 %v187
    %v220 = vunpack.c.l.b16 %v188
    %v221 = vunpack.c.l.b16 %v189
    %v222 = vunpack.c.l.b16 %v190
    %v223 = vunpack.c.l.b16 %v191
    %v224 = vunpack.c.l.b16 %v192
    %v225 = vunpack.c.l.b16 %v193
    %v226 = vunpack.c.l.b16 %v194
    %v227 = vunpack.c.l.b16 %v195
    %v228 = vunpack.c.l.b16 %v196
    %v229 = vpack.c.b16 %v214, %v213
    %v230 = vpack.c.b16 %v216, %v215
    %v231 = vpack.c.b16 %v218, %v217
    %v232 = vpack.c.b16 %v220, %v219
    %v233 = vpack.c.b16 %v222, %v221
    %v234 = vpack.c.b16 %v224, %v223
    %v235 = vpack.c.b16 %v226, %v225
    %v236 = vpack.c.b16 %v228, %v227
    %245 = vmatprep.subr.bf16.mxu0 0
    %246 = vmatpush1.bf16.msra.mxu0 %v229
    %247 = vmatprep.subr.bf16.mxu0 0
    %248 = vmatpush1.bf16.msra.mxu0 %v230
    %249 = vmatprep.subr.bf16.mxu0 0
    %250 = vmatpush1.bf16.msra.mxu0 %v231
    %251 = vmatprep.subr.bf16.mxu0 0
    %252 = vmatpush1.bf16.msra.mxu0 %v232
    %253 = vmatprep.subr.bf16.mxu0 0
    %254 = vmatpush1.bf16.msra.mxu0 %v233
    %255 = vmatprep.subr.bf16.mxu0 0
    %256 = vmatpush1.bf16.msra.mxu0 %v234
    %257 = vmatprep.subr.bf16.mxu0 0
    %258 = vmatpush1.bf16.msra.mxu0 %v235
    %259 = vmatprep.subr.bf16.mxu0 0
    %260 = vmatpush1.bf16.msra.mxu0 %v236
    %261 = vmatprep.subr.bf16.mxu0 0
    %262 = vmatpush1.bf16.msra.mxu0 0
    %263 = vmatprep.subr.bf16.mxu0 0
    %264 = vmatpush1.bf16.msra.mxu0 0
    %265 = vmatprep.subr.bf16.mxu0 0
    %266 = vmatpush1.bf16.msra.mxu0 0
    %267 = vmatprep.subr.bf16.mxu0 0
    %268 = vmatpush1.bf16.msra.mxu0 0
    %269 = vmatprep.subr.bf16.mxu0 0
    %270 = vmatpush1.bf16.msra.mxu0 0
    %271 = vmatprep.subr.bf16.mxu0 0
    %272 = vmatpush1.bf16.msra.mxu0 0
    %273 = vmatprep.subr.bf16.mxu0 0
    %274 = vmatpush1.bf16.msra.mxu0 0
    %275 = vmatprep.subr.bf16.mxu0 0
    %276 = vmatpush1.bf16.msra.mxu0 0
    %277 = vmatprep.mubr.bf16.mxu0 0
    %278 = vmatmul.mubr.bf16.gmra.mrb[0].mxu0 %v180
    %v279 = vpop.f32.mrb[0].mxu0
    %v280 = vadd.f32 0.0, %v279
    %v281 = vpop.f32.mrb[0].mxu0
    %v282 = vpop.f32.mrb[0].mxu0
    %v283 = vadd.f32 0.0, %v282
    %v284 = vpop.f32.mrb[0].mxu0
    %285 = vdwg.mxu0
    %v286 = vadd.f32 %v178, %v280
    %v287 = vadd.f32 %v179, %v283
    %288 = vst [vmem:[#allocation2] sm:$0xff] %v286
    %289 = vst [vmem:[#allocation2 + $0x8] sm:$0xff] %v287
    // Predicated region
    $region30: #{tpu_custom_call.1} parent=1 // pred_check
      %p290 = pneg %p57
    $region31: #{tpu_custom_call.1} parent=1 // pred_check_branch
      %292 = sbr.rel (%p290) target = $region33
    $region32: #{tpu_custom_call.1} parent=1 // pred_region
      %v293 = vld [vmem:[#allocation2] sm:$0xff]
      %v294 = vld [vmem:[#allocation2 + $0x8] sm:$0xff]
      %295 = vst [vmem:[#allocation9] sm:$0xff] %v293
      %296 = vst [vmem:[#allocation9 + $0x8] sm:$0xff] %v294
    $region33: #{tpu_custom_call.1} parent=1 // pred_fallthru
      _
    // Predicated region
    $region34: #{tpu_custom_call.1} parent=1 // pred_check
      _
    $region35: #{tpu_custom_call.1} parent=1 // pred_check_branch
      %298 = sbr.rel (0) target = $region37
    $region36: #{tpu_custom_call.1} parent=1 // pred_region
      %s300 = ssub.s32 256, 256
      %301 = vsyncadd [#allocation5], %s300
      %s302 = sshll.u32 [#allocation9], 4
      %s303 = int_to_ptr.vmem [resolvable:$true] %s302
      %308 = dma.vmem_to_hbm [thread:$0]  %s303, 256, %s3, [#allocation5], 128, 128, 8
    $region37: #{tpu_custom_call.1} parent=1 // pred_fallthru
      _
    // Predicated region
    $region38: #{tpu_custom_call.1} parent=1 // pred_check
      _
    $region39: #{tpu_custom_call.1} parent=1 // pred_check_branch
      %310 = sbr.rel (0) target = $region41
    $region40: #{tpu_custom_call.1} parent=1 // pred_region
      %311 = dma.done [#allocation5], 256
    $region41: #{tpu_custom_call.1} parent=1 // pred_fallthru
      _
    %312 = vsyncpa [#allocation4], 1
    %313 = vsyncpa [#allocation7], 1
    %314 = vsyncpa [#allocation5], 1

</llo_original>
